<compile_context>
chip_gen: v7x
topology: tpu7x:2x2x1
jax: 0.10.0
libtpu: 0.0.40
codegen_flags: <defaults>
</compile_context>

<pallas_src>
import functools

import jax
import jax.numpy as jnp
from jax.experimental import pallas as pl
from jax.experimental.pallas import tpu as pltpu


def agent_forward_kernel(h_ref, w1_ref, b1_ref, w2_ref, b2_ref, out_ref,
                         acc_ref, *, inv_seq_len, seq_chunk):
    """Streamed sum_s(h_s @ W1) over grid axis 1 + mean/bias/relu/fc2 epilogue."""
    s = pl.program_id(1)

    @pl.when(s == 0)
    def _init():
        acc_ref[...] = jnp.zeros_like(acc_ref)

    tb, ts, hdim = h_ref.shape
    d1 = w1_ref.shape[1]
    n_chunks = ts // seq_chunk          # static; seq_chunk divides ts

    def chunk_body(c, carry):
        start = pl.multiple_of(c * seq_chunk, seq_chunk)
        hc = h_ref[:, pl.ds(start, seq_chunk), :]                 # (TB, C, H) bf16
        z = jnp.dot(hc.reshape(tb * seq_chunk, hdim), w1_ref[...],
                    preferred_element_type=jnp.float32)           # (TB*C, D1) f32
        acc_ref[...] += z.reshape(tb, seq_chunk, d1).sum(axis=1)  # (TB, D1) f32
        return carry

    jax.lax.fori_loop(0, n_chunks, chunk_body, 0, unroll=(n_chunks <= 8))

    @pl.when(s == pl.num_programs(1) - 1)
    def _epilogue():
        # mean over seq folded into a single scale of the accumulated fc1 output.
        z1 = acc_ref[...] * inv_seq_len + b1_ref[...].astype(jnp.float32)
        a1 = jnp.maximum(z1, 0.0)       # dropout is identity at eval time
        out = jnp.dot(a1, w2_ref[...].astype(jnp.float32),
                      preferred_element_type=jnp.float32)         # (TB, A_pad)
        out_ref[...] = (out + b2_ref[...].astype(jnp.float32)).astype(out_ref.dtype)


def _largest_aligned_divisor(n, align, cap):
    """Largest d with n % d == 0, d % align == 0, d <= cap (None if none)."""
    best = None
    d = align
    limit = min(n, cap)
    while d <= limit:
        if n % d == 0:
            best = d
        d += align
    return best


def _vmem_capacity_bytes():
    """Generation-aware VMEM capacity (v5e/v6e: 128 MiB, v7x: 64 MiB per core)."""
    try:
        cap = int(pltpu.get_tpu_info().vmem_capacity_bytes)
        if cap > 0:
            return cap
    except Exception:
        pass
    return 64 * 1024 * 1024     # conservative fallback (v7x per-TensorCore)


def _const_spec(shape):
    """Constant-index block (weights/bias): fetched once, single-buffered."""
    index_map = lambda b, s: (0,) * len(shape)
    try:
        return pl.BlockSpec(shape, index_map, pipeline_mode=pl.Buffered(1))
    except (TypeError, AttributeError):
        return pl.BlockSpec(shape, index_map)


def prepare_agent_params(w1, b1, w2, b2, *, lane=128):
    """Pad fc2 columns to a lane-dense width once (hoisted out of per-call path)."""
    D1, A = w2.shape
    A_pad = max(lane, ((A + lane - 1) // lane) * lane)
    w2_p = jnp.zeros((D1, A_pad), dtype=w2.dtype).at[:, :A].set(w2)
    b2_p = jnp.zeros((1, A_pad), dtype=b2.dtype).at[0, :A].set(b2)
    return w1, b1.reshape(1, -1), w2_p, b2_p, A


def agent_forward(hidden_states, w1, b1_2d, w2_pad, b2_pad, num_actions, *,
                  batch_tile=None, seq_tile=None):
    """Q-network forward on pooled transformer hidden states.

    hidden_states: (B, S, H); w1: (H, D1); b1_2d: (1, D1);
    w2_pad: (D1, A_pad); b2_pad: (1, A_pad). Returns (B, num_actions) float32.
    """
    B, S, H = hidden_states.shape
    D1 = w1.shape[1]
    A_pad = w2_pad.shape[1]
    itemsize_h = jnp.dtype(hidden_states.dtype).itemsize

    # Pad batch to a multiple of 8 (sublane-aligned layouts, unmasked stores).
    B_pad = ((B + 7) // 8) * 8
    if B_pad != B:
        hidden_states = jnp.pad(hidden_states,
                                ((0, B_pad - B), (0, 0), (0, 0)))

    # ---- generation-aware VMEM budget ------------------------------------
    vmem_cap = _vmem_capacity_bytes()
    vmem_limit = min(max(32 * 1024 * 1024, int(vmem_cap * 0.85)),
                     100 * 1024 * 1024)
    w_itemsize = jnp.dtype(w1.dtype).itemsize
    weight_bytes = ((H * D1 + D1) * w_itemsize
                    + (D1 * A_pad + A_pad) * jnp.dtype(w2_pad.dtype).itemsize)
    # ~half the limit for the double-buffered hidden stream; the rest covers the
    # single-buffered weights, (TB,D1) f32 acc, chunked fc1 temp, output, scratch.
    stream_budget = int(vmem_limit * 0.5) - weight_bytes
    per_buffer = max(1 << 20, min(stream_budget // 2, 8 << 20))

    # ---- tile selection ----------------------------------------------------
    if batch_tile is None:
        tb_cap = 256
        if B_pad >= 16:                        # keep >=2 batch tiles so the
            tb_cap = min(tb_cap, B_pad // 2)   # "parallel" axis feeds 2 cores
        min_ts = min(S, 16)
        tb_cap = min(tb_cap,
                     max(8, per_buffer // max(1, min_ts * H * itemsize_h)))
        batch_tile = _largest_aligned_divisor(B_pad, 8, max(8, tb_cap)) or 8
    TB = batch_tile
    assert B_pad % TB == 0, (B_pad, TB)

    if seq_tile is None:
        ts_cap = max(8, per_buffer // max(1, TB * H * itemsize_h))
        aligns = (16, 8) if itemsize_h == 2 else (8,)
        seq_tile = None
        for align in aligns:
            seq_tile = _largest_aligned_divisor(S, align, ts_cap)
            if seq_tile is not None:
                break
        if seq_tile is None:
            seq_tile = S            # full-extent block is always legal
    TS = seq_tile
    assert S % TS == 0, (S, TS)

    # Chunk the in-block fc1/reduce so its f32 intermediate stays ~<=4 MiB.
    chunk_cap = max(8, (4 << 20) // max(1, TB * D1 * 4))
    seq_chunk = TS
    for c in (32, 16, 8):
        if TS % c == 0 and c <= chunk_cap:
            seq_chunk = c
            break

    grid = (B_pad // TB, S // TS)       # reduction (seq) axis last

    kernel = functools.partial(agent_forward_kernel,
                               inv_seq_len=float(1.0 / S),
                               seq_chunk=seq_chunk)

    bytes_accessed = (B_pad * S * H * itemsize_h + weight_bytes
                      + B_pad * A_pad * 4)
    flops = 2 * B_pad * S * H * D1 + 2 * B_pad * D1 * A_pad

    out_padded = pl.pallas_call(
        kernel,
        out_shape=jax.ShapeDtypeStruct((B_pad, A_pad), jnp.float32),
        grid_spec=pltpu.PrefetchScalarGridSpec(
            num_scalar_prefetch=0,
            grid=grid,
            in_specs=[
                pl.BlockSpec((TB, TS, H), lambda b, s: (b, s, 0)),   # hidden
                _const_spec((H, D1)),                                # w1
                _const_spec((1, D1)),                                # b1
                _const_spec((D1, A_pad)),                            # w2 (padded)
                _const_spec((1, A_pad)),                             # b2 (padded)
            ],
            out_specs=pl.BlockSpec((TB, A_pad), lambda b, s: (b, 0)),
            scratch_shapes=[pltpu.VMEM((TB, D1), jnp.float32)],
        ),
        compiler_params=pltpu.CompilerParams(
            dimension_semantics=("parallel", "arbitrary"),
            vmem_limit_bytes=vmem_limit,
        ),
        cost_estimate=pl.CostEstimate(
            flops=int(flops), transcendentals=0,
            bytes_accessed=int(bytes_accessed)),
    )(hidden_states, w1, b1_2d, w2_pad, b2_pad)

    return out_padded[:B, :num_actions]


def agent_forward_ref(hidden_states, w1, b1, w2, b2):
    """Pure-JAX reference (f32 accumulation throughout)."""
    x = jnp.mean(hidden_states.astype(jnp.float32), axis=1)
    z1 = x @ w1.astype(jnp.float32) + b1.astype(jnp.float32)
    a1 = jnp.maximum(z1, 0.0)
    return a1 @ w2.astype(jnp.float32) + b2.astype(jnp.float32)


if __name__ == "__main__":
    # Small shapes consistent with the module's forward:
    # batch, seq (max_len), transformer hidden dim, fc1 hidden dim, num_actions.
    B, S, H, D1, A = 8, 16, 128, 128, 3

    key = jax.random.PRNGKey(0)
    k_h, k_w1, k_b1, k_w2, k_b2 = jax.random.split(key, 5)

    hidden_states = jax.random.normal(
        k_h, (B, S, H), dtype=jnp.float32).astype(jnp.bfloat16)
    w1 = (jax.random.normal(k_w1, (H, D1), dtype=jnp.float32) * 0.05
          ).astype(jnp.bfloat16)
    b1 = (jax.random.normal(k_b1, (D1,), dtype=jnp.float32) * 0.05
          ).astype(jnp.bfloat16)
    w2 = (jax.random.normal(k_w2, (D1, A), dtype=jnp.float32) * 0.05
          ).astype(jnp.bfloat16)
    b2 = (jax.random.normal(k_b2, (A,), dtype=jnp.float32) * 0.05
          ).astype(jnp.bfloat16)

    # Lane padding / reshape done once (hoisted out of the per-call path).
    w1_p, b1_p, w2_p, b2_p, num_actions = prepare_agent_params(w1, b1, w2, b2)

    # seq_tile=8 -> two seq grid steps: exercises the streamed accumulation
    # (pl.when init at s==0) and the epilogue at the last seq step.
    out = agent_forward(hidden_states, w1_p, b1_p, w2_p, b2_p, num_actions,
                        seq_tile=8)
    out = jax.block_until_ready(out)

    ref = agent_forward_ref(hidden_states, w1, b1, w2, b2)
    assert out.shape == (B, A), out.shape
    err = float(jnp.max(jnp.abs(out - ref)))
    # Both sides use f32 accumulation over bf16-valued operands; only the
    # accumulation order differs.
    assert jnp.allclose(out, ref, atol=1e-3, rtol=1e-3), err

    print("KERNEL_OK")
</pallas_src>

<mosaic_0001>
module attributes {stable_mosaic.version = 11 : i64} {
  func.func @agent_forward_kernel(%arg0: i32, %arg1: i32, %arg2: memref<8x8x128xbf16, #tpu.memory_space<vmem>>, %arg3: memref<128x128xbf16, #tpu.memory_space<vmem>>, %arg4: memref<1x128xbf16, #tpu.memory_space<vmem>>, %arg5: memref<128x128xbf16, #tpu.memory_space<vmem>>, %arg6: memref<1x128xbf16, #tpu.memory_space<vmem>>, %arg7: memref<8x128xf32, #tpu.memory_space<vmem>>, %arg8: memref<8x128xf32, #tpu.memory_space<vmem>>) attributes {dimension_semantics = [#tpu.dimension_semantics<parallel>, #tpu.dimension_semantics<arbitrary>], iteration_bounds = array<i64: 1, 2>, scalar_prefetch = 0 : i64, scratch_operands = 1 : i64, tpu.core_type = #tpu.core_type<tc>, window_params = [{transform_indices = @transform_0, window_bounds = array<i64: 8, 8, 128>}, {pipeline_mode = #tpu.pipeline_mode<synchronous>, transform_indices = @transform_1, window_bounds = array<i64: 128, 128>}, {pipeline_mode = #tpu.pipeline_mode<synchronous>, transform_indices = @transform_2, window_bounds = array<i64: 1, 128>}, {pipeline_mode = #tpu.pipeline_mode<synchronous>, transform_indices = @transform_3, window_bounds = array<i64: 128, 128>}, {pipeline_mode = #tpu.pipeline_mode<synchronous>, transform_indices = @transform_4, window_bounds = array<i64: 1, 128>}, {transform_indices = @transform_5, window_bounds = array<i64: 8, 128>}]} {
    %c0_i32 = arith.constant 0 : i32
    %0 = arith.cmpi eq, %arg1, %c0_i32 : i32
    %1 = arith.extui %0 : i1 to i32
    %c0_i32_0 = arith.constant 0 : i32
    %2 = arith.cmpi ne, %1, %c0_i32_0 : i32
    scf.if %2 {
      %cst_12 = arith.constant 0.000000e+00 : f32
      %18 = vector.broadcast %cst_12 : f32 to vector<8x128xf32>
      %c0_13 = arith.constant 0 : index
      %c0_14 = arith.constant 0 : index
      %19 = vector.load %arg8[%c0_13, %c0_14] : memref<8x128xf32, #tpu.memory_space<vmem>>, vector<8x128xf32>
      tpu.vector_store %arg8[%c0_13, %c0_14], %18 {strides = array<i32>} : memref<8x128xf32, #tpu.memory_space<vmem>>, vector<8x128xf32>,
    } else {
    }
    %c0_i32_1 = arith.constant 0 : i32
    %c8_i32 = arith.constant 8 : i32
    %3 = arith.muli %c0_i32_1, %c8_i32 : i32
    %4 = tpu.assume_multiple %3, 8 : i32
    %c0 = arith.constant 0 : index
    %5 = arith.index_cast %4 : i32 to index
    %c0_2 = arith.constant 0 : index
    %6 = vector.load %arg2[%c0, %5, %c0_2] : memref<8x8x128xbf16, #tpu.memory_space<vmem>>, vector<8x8x128xbf16>
    %7 = vector.shape_cast %6 : vector<8x8x128xbf16> to vector<64x128xbf16>
    %c0_3 = arith.constant 0 : index
    %c0_4 = arith.constant 0 : index
    %8 = vector.load %arg3[%c0_3, %c0_4] : memref<128x128xbf16, #tpu.memory_space<vmem>>, vector<128x128xbf16>
    %cst = arith.constant dense<0.000000e+00> : vector<64x128xf32>
    %9 = tpu.matmul %7, %8, %cst {dimension_numbers = #tpu.dot_dimension_numbers<[1], [0], [0], [1], [0, 0, 1, 1], [], []>} : vector<64x128xbf16>, vector<128x128xbf16>, vector<64x128xf32> -> vector<64x128xf32>
    %c0_5 = arith.constant 0 : index
    %c0_6 = arith.constant 0 : index
    %10 = vector.load %arg8[%c0_5, %c0_6] : memref<8x128xf32, #tpu.memory_space<vmem>>, vector<8x128xf32>
    %11 = vector.shape_cast %9 : vector<64x128xf32> to vector<8x8x128xf32>
    %cst_7 = arith.constant dense<0.000000e+00> : vector<8x128xf32>
    %12 = vector.multi_reduction <add>, %11, %cst_7 [1] : vector<8x8x128xf32> to vector<8x128xf32>
    %13 = arith.addf %10, %12 : vector<8x128xf32>
    %c0_8 = arith.constant 0 : index
    %c0_9 = arith.constant 0 : index
    %14 = vector.load %arg8[%c0_8, %c0_9] : memref<8x128xf32, #tpu.memory_space<vmem>>, vector<8x128xf32>
    tpu.vector_store %arg8[%c0_8, %c0_9], %13 {strides = array<i32>} : memref<8x128xf32, #tpu.memory_space<vmem>>, vector<8x128xf32>,
    %c1_i32 = arith.constant 1 : i32
    %c1_i32_10 = arith.constant 1 : i32
    %15 = arith.cmpi eq, %arg1, %c1_i32_10 : i32
    %16 = arith.extui %15 : i1 to i32
    %c0_i32_11 = arith.constant 0 : i32
    %17 = arith.cmpi ne, %16, %c0_i32_11 : i32
    scf.if %17 {
      %c0_12 = arith.constant 0 : index
      %c0_13 = arith.constant 0 : index
      %18 = vector.load %arg8[%c0_12, %c0_13] : memref<8x128xf32, #tpu.memory_space<vmem>>, vector<8x128xf32>
      %cst_14 = arith.constant 6.250000e-02 : f32
      %19 = vector.broadcast %cst_14 : f32 to vector<8x128xf32>
      %20 = arith.mulf %18, %19 : vector<8x128xf32>
      %c0_15 = arith.constant 0 : index
      %c0_16 = arith.constant 0 : index
      %21 = vector.load %arg4[%c0_15, %c0_16] : memref<1x128xbf16, #tpu.memory_space<vmem>>, vector<1x128xbf16>
      %22 = arith.extf %21 : vector<1x128xbf16> to vector<1x128xf32>
      %23 = vector.broadcast %22 : vector<1x128xf32> to vector<8x128xf32>
      %24 = arith.addf %20, %23 : vector<8x128xf32>
      %cst_17 = arith.constant 0.000000e+00 : f32
      %25 = vector.broadcast %cst_17 : f32 to vector<8x128xf32>
      %26 = arith.maximumf %24, %25 : vector<8x128xf32>
      %c0_18 = arith.constant 0 : index
      %c0_19 = arith.constant 0 : index
      %27 = vector.load %arg5[%c0_18, %c0_19] : memref<128x128xbf16, #tpu.memory_space<vmem>>, vector<128x128xbf16>
      %28 = arith.extf %27 : vector<128x128xbf16> to vector<128x128xf32>
      %cst_20 = arith.constant dense<0.000000e+00> : vector<8x128xf32>
      %29 = tpu.matmul %26, %28, %cst_20 {dimension_numbers = #tpu.dot_dimension_numbers<[1], [0], [0], [1], [0, 0, 1, 1], [], []>} : vector<8x128xf32>, vector<128x128xf32>, vector<8x128xf32> -> vector<8x128xf32>
      %c0_21 = arith.constant 0 : index
      %c0_22 = arith.constant 0 : index
      %30 = vector.load %arg6[%c0_21, %c0_22] : memref<1x128xbf16, #tpu.memory_space<vmem>>, vector<1x128xbf16>
      %31 = arith.extf %30 : vector<1x128xbf16> to vector<1x128xf32>
      %32 = vector.broadcast %31 : vector<1x128xf32> to vector<8x128xf32>
      %33 = arith.addf %29, %32 : vector<8x128xf32>
      %c0_23 = arith.constant 0 : index
      %c0_24 = arith.constant 0 : index
      %34 = vector.load %arg7[%c0_23, %c0_24] : memref<8x128xf32, #tpu.memory_space<vmem>>, vector<8x128xf32>
      tpu.vector_store %arg7[%c0_23, %c0_24], %33 {strides = array<i32>} : memref<8x128xf32, #tpu.memory_space<vmem>>, vector<8x128xf32>,
    } else {
    }
    return
  }
  func.func @transform_0(%arg0: i32, %arg1: i32) -> (i32, i32, i32) {
    %c0_i32 = arith.constant 0 : i32
    %c0_i32_0 = arith.constant 0 : i32
    return %arg0, %arg1, %c0_i32 : i32, i32, i32
  }
  func.func @transform_1(%arg0: i32, %arg1: i32) -> (i32, i32) {
    %c0_i32 = arith.constant 0 : i32
    %c0_i32_0 = arith.constant 0 : i32
    %c0_i32_1 = arith.constant 0 : i32
    return %c0_i32, %c0_i32_0 : i32, i32
  }
  func.func @transform_2(%arg0: i32, %arg1: i32) -> (i32, i32) {
    %c0_i32 = arith.constant 0 : i32
    %c0_i32_0 = arith.constant 0 : i32
    %c0_i32_1 = arith.constant 0 : i32
    return %c0_i32, %c0_i32_0 : i32, i32
  }
  func.func @transform_3(%arg0: i32, %arg1: i32) -> (i32, i32) {
    %c0_i32 = arith.constant 0 : i32
    %c0_i32_0 = arith.constant 0 : i32
    %c0_i32_1 = arith.constant 0 : i32
    return %c0_i32, %c0_i32_0 : i32, i32
  }
  func.func @transform_4(%arg0: i32, %arg1: i32) -> (i32, i32) {
    %c0_i32 = arith.constant 0 : i32
    %c0_i32_0 = arith.constant 0 : i32
    %c0_i32_1 = arith.constant 0 : i32
    return %c0_i32, %c0_i32_0 : i32, i32
  }
  func.func @transform_5(%arg0: i32, %arg1: i32) -> (i32, i32) {
    %c0_i32 = arith.constant 0 : i32
    %c0_i32_0 = arith.constant 0 : i32
    return %arg0, %c0_i32 : i32, i32
  }
}

</mosaic_0001>

<llo_original>
// kernel: tpu_custom_call.1
$region0: #{tpu_custom_call.1}
  #allocation0 [shape = 'u32[]', space=smem, size = 0x4, offset = 0x4, fixed_abs, tag = 'smem constant byte address 0x4 - core index']
  #allocation1 [shape = 'u32[144,128]{1,0:T(1,128)}', space=vmem, size = 0x12000, scoped, tag = 'internal scratch']
  #allocation2 [shape = 'f32[8,128]{1,0:T(8,128)}', space=vmem, size = 0x1000, scoped, tag = 'scratch operand']
  %s0 = inlined_call_operand.hbm [shape: bf16[8,16,128], index: 0, kind: input, shape index: {}]
  %s1 = inlined_call_operand.hbm [shape: bf16[128,128], index: 1, kind: input, shape index: {}]
  %s2 = inlined_call_operand.vmem [shape: bf16[1,128], index: 2, kind: input, shape index: {}]
  %s3 = inlined_call_operand.hbm [shape: bf16[128,128], index: 3, kind: input, shape index: {}]
  %s4 = inlined_call_operand.vmem [shape: bf16[1,128], index: 4, kind: input, shape index: {}]
  %s5 = inlined_call_operand.hbm [shape: f32[8,128], index: 5, kind: output, shape index: {}]
  %s6 = sld [smem:[#allocation0]]
  $region73: #{tpu_custom_call.1} parent=0
    _
  %s8 = ssub.s32 1, %s6
  %s9 = scalar_select 0, %s8, %s6
  $region1: #{tpu_custom_call.1} parent=0
    #allocation3 [shape = 'u8[32768]{0}', space=vmem, size = 0x8000, scoped, tag = 'input window, operand 0']
    #allocation4 [shape = 's32[2]{0}', space=sflag, size = 0x8, scoped, tag = 'scoped memory for tpu_custom_call.1']
    #allocation5 [shape = 's32[2]{0}', space=sflag, size = 0x8, scoped, tag = 'scoped memory for tpu_custom_call.1']
    #allocation6 [shape = 'u8[32768]{0}', space=vmem, size = 0x8000, scoped, tag = 'input window, operand 1, single buffered']
    #allocation7 [shape = 's32[1]{0}', space=sflag, size = 0x4, scoped, tag = 'scoped memory for tpu_custom_call.1']
    #allocation8 [shape = 'u8[32768]{0}', space=vmem, size = 0x8000, scoped, tag = 'input window, operand 3, single buffered']
    #allocation9 [shape = 'u8[4096]{0}', space=vmem, size = 0x1000, scoped, tag = 'output window, operand 0, single buffered']
    %10 = vsyncpa [#allocation4], 0
    %s11 = scalar_lea.sflag [#allocation4], 1
    %12 = vsyncpa %s11, 0
    %13 = vsyncpa [#allocation7], 0
    %14 = vsyncpa [#allocation5], 0
    loop: start=0, step=1, limit=4
    $region2: #{tpu_custom_call.1} parent=1 // loop_pre_header
      _
    $region3: #{tpu_custom_call.1} parent=1 // loop_header
      %s16 = sphi 0, %s20
      %p17 = scmp.ge.s32.totalorder %s16, 4
      %s23 = sphi 0, %s35
      %s24 = sphi 0, %s31
      %s25 = sphi 0, %s23
      %s26 = sphi 0, %s24
      %s27 = sphi 0, %s25
      %s28 = sphi 0, %s26
      %s40 = sphi 0, %s42
      %s43 = sphi 0, %s40
      %s44 = sphi 0, %s43
      %s60 = sphi 0, %s44
      %s64 = sphi 0, %s64
      %s66 = sphi 0, %s64
      %s67 = sphi 0, %s66
      %s81 = sphi 0, %s67
      %s85 = sphi 0, %s85
      %s87 = sphi 0, %s85
      %s88 = sphi 0, %s87
      %s102 = sphi 0, %s88
      %s106 = sphi 0, %s106
      %s108 = sphi 0, %s106
      %s109 = sphi 0, %s108
      %s123 = sphi 0, %s109
      %s127 = sphi 0, %s127
      %s129 = sphi 0, %s127
      %s130 = sphi 0, %s129
      %s144 = sphi 0, %s130
      %s150 = sphi 0, %s152
      %s153 = sphi 0, %s150
      %s154 = sphi 0, %s153
      %s170 = sphi 0, %s154
    $region4: #{tpu_custom_call.1} parent=1 // loop_header_branch
      %19 = sbr.rel (%p17) target = $region8
    $region5: #{tpu_custom_call.1} parent=1 // loop_body
      %s21 = ssub.s32 %s16, 1
      %s22 = ssub.s32 %s16, 2
      %s29 = sadd.s32 1, %s24
      %p30 = scmp.ge.s32.totalorder %s29, 2
      %s31 = scalar_select %p30, 0, %s29
      %s32 = sadd.s32 1, %s23
      %s33 = scalar_select %p30, %s32, %s23
      %p34 = scmp.ge.s32.totalorder %s33, 1
      %s35 = scalar_select %p34, 0, %s33
      %s36 = ssub.s32 %s23, %s35
      %s37 = ssub.s32 %s24, %s31
      %s38 = sor.u32 %s36, %s37
      %p39 = scmp.eq.s32.totalorder %s38, 0
      %s41 = sadd.s32 %s40, 1
      %s42 = scalar_select %p39, %s40, %s41
      %p45 = pneg %p39
      %p46 = scmp.eq.s32.totalorder %s16, 1
      %p47 = por %p45, %p46
      %p48 = scmp.ne.s32.totalorder %s40, %s43
      %p49 = scmp.eq.s32.totalorder %s16, 0
      %p50 = por %p48, %p49
      %p51 = scmp.ne.s32.totalorder %s40, %s43
      %p52 = scmp.eq.s32.totalorder %s21, 1
      %p53 = por %p51, %p52
      %p54 = scmp.ne.s32.totalorder %s43, %s44
      %p55 = scmp.eq.s32.totalorder %s21, 0
      %p56 = por %p54, %p55
      %p57 = scmp.ne.s32.totalorder %s43, %s44
      %p58 = scmp.eq.s32.totalorder %s22, 1
      %p59 = por %p57, %p58
      %p61 = scmp.ne.s32.totalorder %s44, %s60
      %p62 = scmp.eq.s32.totalorder %s22, 0
      %p63 = por %p61, %p62
      %s65 = sadd.s32 %s64, 1
      %p68 = scmp.eq.s32.totalorder %s16, 1
      %p69 = scmp.ne.s32.totalorder %s64, %s66
      %p70 = scmp.eq.s32.totalorder %s16, 0
      %p71 = por %p69, %p70
      %p72 = scmp.ne.s32.totalorder %s64, %s66
      %p73 = scmp.eq.s32.totalorder %s21, 1
      %p74 = por %p72, %p73
      %p75 = scmp.ne.s32.totalorder %s66, %s67
      %p76 = scmp.eq.s32.totalorder %s21, 0
      %p77 = por %p75, %p76
      %p78 = scmp.ne.s32.totalorder %s66, %s67
      %p79 = scmp.eq.s32.totalorder %s22, 1
      %p80 = por %p78, %p79
      %p82 = scmp.ne.s32.totalorder %s67, %s81
      %p83 = scmp.eq.s32.totalorder %s22, 0
      %p84 = por %p82, %p83
      %s86 = sadd.s32 %s85, 1
      %p89 = scmp.eq.s32.totalorder %s16, 1
      %p90 = scmp.ne.s32.totalorder %s85, %s87
      %p91 = scmp.eq.s32.totalorder %s16, 0
      %p92 = por %p90, %p91
      %p93 = scmp.ne.s32.totalorder %s85, %s87
      %p94 = scmp.eq.s32.totalorder %s21, 1
      %p95 = por %p93, %p94
      %p96 = scmp.ne.s32.totalorder %s87, %s88
      %p97 = scmp.eq.s32.totalorder %s21, 0
      %p98 = por %p96, %p97
      %p99 = scmp.ne.s32.totalorder %s87, %s88
      %p100 = scmp.eq.s32.totalorder %s22, 1
      %p101 = por %p99, %p100
      %p103 = scmp.ne.s32.totalorder %s88, %s102
      %p104 = scmp.eq.s32.totalorder %s22, 0
      %p105 = por %p103, %p104
      %s107 = sadd.s32 %s106, 1
      %p110 = scmp.eq.s32.totalorder %s16, 1
      %p111 = scmp.ne.s32.totalorder %s106, %s108
      %p112 = scmp.eq.s32.totalorder %s16, 0
      %p113 = por %p111, %p112
      %p114 = scmp.ne.s32.totalorder %s106, %s108
      %p115 = scmp.eq.s32.totalorder %s21, 1
      %p116 = por %p114, %p115
      %p117 = scmp.ne.s32.totalorder %s108, %s109
      %p118 = scmp.eq.s32.totalorder %s21, 0
      %p119 = por %p117, %p118
      %p120 = scmp.ne.s32.totalorder %s108, %s109
      %p121 = scmp.eq.s32.totalorder %s22, 1
      %p122 = por %p120, %p121
      %p124 = scmp.ne.s32.totalorder %s109, %s123
      %p125 = scmp.eq.s32.totalorder %s22, 0
      %p126 = por %p124, %p125
      %s128 = sadd.s32 %s127, 1
      %p131 = scmp.eq.s32.totalorder %s16, 1
      %p132 = scmp.ne.s32.totalorder %s127, %s129
      %p133 = scmp.eq.s32.totalorder %s16, 0
      %p134 = por %p132, %p133
      %p135 = scmp.ne.s32.totalorder %s127, %s129
      %p136 = scmp.eq.s32.totalorder %s21, 1
      %p137 = por %p135, %p136
      %p138 = scmp.ne.s32.totalorder %s129, %s130
      %p139 = scmp.eq.s32.totalorder %s21, 0
      %p140 = por %p138, %p139
      %p141 = scmp.ne.s32.totalorder %s129, %s130
      %p142 = scmp.eq.s32.totalorder %s22, 1
      %p143 = por %p141, %p142
      %p145 = scmp.ne.s32.totalorder %s130, %s144
      %p146 = scmp.eq.s32.totalorder %s22, 0
      %p147 = por %p145, %p146
      %s148 = ssub.s32 %s23, %s35
      %p149 = scmp.eq.s32.totalorder %s148, 0
      %s151 = sadd.s32 %s150, 1
      %s152 = scalar_select %p149, %s150, %s151
      %p155 = pneg %p149
      %p156 = scmp.eq.s32.totalorder %s16, 1
      %p157 = por %p155, %p156
      %p158 = scmp.ne.s32.totalorder %s150, %s153
      %p159 = scmp.eq.s32.totalorder %s16, 0
      %p160 = por %p158, %p159
      %p161 = scmp.ne.s32.totalorder %s150, %s153
      %p162 = scmp.eq.s32.totalorder %s21, 1
      %p163 = por %p161, %p162
      %p164 = scmp.ne.s32.totalorder %s153, %s154
      %p165 = scmp.eq.s32.totalorder %s21, 0
      %p166 = por %p164, %p165
      %p167 = scmp.ne.s32.totalorder %s153, %s154
      %p168 = scmp.eq.s32.totalorder %s22, 1
      %p169 = por %p167, %p168
      %p171 = scmp.ne.s32.totalorder %s154, %s170
      %p172 = scmp.eq.s32.totalorder %s22, 0
      %p173 = por %p171, %p172
      %p174 = scmp.le.s32.totalorder 1, %s16
      %p175 = scmp.lt.s32.totalorder %s16, 3
      %p176 = pnand %p174, %p175
      %p177 = pneg %p176
      // Predicated region
      $region9: #{tpu_custom_call.1} parent=5 // pred_check
        _
      $region10: #{tpu_custom_call.1} parent=5 // pred_check_branch
        %179 = sbr.rel (%p176) target = $region12
      $region11: #{tpu_custom_call.1} parent=5 // pred_region
        %s180 = ssub.s32 %s16, 1
        // Predicated region
        $region13: #{tpu_custom_call.1} parent=11 // pred_check
          %p181 = pneg %p77
        $region14: #{tpu_custom_call.1} parent=11 // pred_check_branch
          %183 = sbr.rel (%p181) target = $region16
        $region15: #{tpu_custom_call.1} parent=11 // pred_region
          %s185 = ssub.s32 1024, 1024
          %186 = vsyncadd [#allocation7], %s185
          %s187 = sshll.u32 [#allocation6], 4
          %s188 = int_to_ptr.vmem [resolvable:$true] %s187
          %193 = dma.hbm_to_vmem [thread:$0]  %s1, 1024, %s188, [#allocation7], 64, 64, 4
        $region16: #{tpu_custom_call.1} parent=11 // pred_fallthru
          _
        // Predicated region
        $region17: #{tpu_custom_call.1} parent=11 // pred_check
          %p194 = pneg %p98
        $region18: #{tpu_custom_call.1} parent=11 // pred_check_branch
          %196 = sbr.rel (%p194) target = $region20
        $region19: #{tpu_custom_call.1} parent=11 // pred_region
          _
        $region20: #{tpu_custom_call.1} parent=11 // pred_fallthru
          _
        // Predicated region
        $region21: #{tpu_custom_call.1} parent=11 // pred_check
          %p197 = pneg %p119
        $region22: #{tpu_custom_call.1} parent=11 // pred_check_branch
          %199 = sbr.rel (%p197) target = $region24
        $region23: #{tpu_custom_call.1} parent=11 // pred_region
          %s201 = ssub.s32 1024, 1024
          %202 = vsyncadd [#allocation7], %s201
          %s203 = sshll.u32 [#allocation8], 4
          %s204 = int_to_ptr.vmem [resolvable:$true] %s203
          %209 = dma.hbm_to_vmem [thread:$0]  %s3, 1024, %s204, [#allocation7], 64, 64, 4
        $region24: #{tpu_custom_call.1} parent=11 // pred_fallthru
          _
        // Predicated region
        $region25: #{tpu_custom_call.1} parent=11 // pred_check
          %p210 = pneg %p140
        $region26: #{tpu_custom_call.1} parent=11 // pred_check_branch
          %212 = sbr.rel (%p210) target = $region28
        $region27: #{tpu_custom_call.1} parent=11 // pred_region
          _
        $region28: #{tpu_custom_call.1} parent=11 // pred_fallthru
          _
      $region12: #{tpu_custom_call.1} parent=5 // pred_fallthru
        _
      %p213 = scmp.lt.s32.totalorder %s16, 2
      // Predicated region
      $region29: #{tpu_custom_call.1} parent=5 // pred_check
        %p214 = pneg %p213
      $region30: #{tpu_custom_call.1} parent=5 // pred_check_branch
        %216 = sbr.rel (%p214) target = $region32
      $region31: #{tpu_custom_call.1} parent=5 // pred_region
        // Predicated region
        $region33: #{tpu_custom_call.1} parent=31 // pred_check
          %p217 = pneg %p50
        $region34: #{tpu_custom_call.1} parent=31 // pred_check_branch
          %219 = sbr.rel (%p217) target = $region36
        $region35: #{tpu_custom_call.1} parent=31 // pred_region
          %s220 = sand.u32 %s40, 1
          %s221 = scalar_lea.sflag [#allocation4], %s220
          %s222 = sand.u32 %s40, 1
          %s223 = smul.addr %s222, 32
          %s224 = scalar_lea.vmem [#allocation3], %s223
          %s225 = smul.u32 8, %s23
          %s227 = ssub.s32 512, 512
          %228 = vsyncadd %s221, %s227
          %s229 = smul.addr %s225, 2
          %s230 = sadd.s32 %s24, %s229
          %s231 = smul.addr %s230, 64
          %s232 = scalar_lea.hbm %s0, %s231
          %s233 = sshll.u32 %s224, 4
          %s234 = int_to_ptr.vmem [resolvable:$true] %s233
          %239 = dma.hbm_to_vmem [thread:$0]  %s232, 512, %s234, %s221, 128, 64, 4
        $region36: #{tpu_custom_call.1} parent=31 // pred_fallthru
          _
      $region32: #{tpu_custom_call.1} parent=5 // pred_fallthru
        _
      %p240 = scmp.le.s32.totalorder 1, %s16
      %p241 = scmp.lt.s32.totalorder %s16, 3
      %p242 = pnand %p240, %p241
      %p243 = pneg %p242
      // Predicated region
      $region37: #{tpu_custom_call.1} parent=5 // pred_check
        _
      $region38: #{tpu_custom_call.1} parent=5 // pred_check_branch
        %245 = sbr.rel (%p242) target = $region40
      $region39: #{tpu_custom_call.1} parent=5 // pred_region
        %s246 = ssub.s32 %s16, 1
        %s247 = sand.u32 %s43, 1
        %s248 = scalar_lea.sflag [#allocation4], %s247
        %s249 = sand.u32 %s43, 1
        %s250 = smul.addr %s249, 32
        %s251 = scalar_lea.vmem [#allocation3], %s250
        // Predicated region
        $region41: #{tpu_custom_call.1} parent=39 // pred_check
          %p252 = pneg %p56
        $region42: #{tpu_custom_call.1} parent=39 // pred_check_branch
          %254 = sbr.rel (%p252) target = $region44
        $region43: #{tpu_custom_call.1} parent=39 // pred_region
          %255 = dma.done %s248, 512
        $region44: #{tpu_custom_call.1} parent=39 // pred_fallthru
          _
        // Predicated region
        $region45: #{tpu_custom_call.1} parent=39 // pred_check
          %p256 = pneg %p77
        $region46: #{tpu_custom_call.1} parent=39 // pred_check_branch
          %258 = sbr.rel (%p256) target = $region48
        $region47: #{tpu_custom_call.1} parent=39 // pred_region
          %259 = dma.done [#allocation7], 1024
        $region48: #{tpu_custom_call.1} parent=39 // pred_fallthru
          _
        // Predicated region
        $region49: #{tpu_custom_call.1} parent=39 // pred_check
          %p260 = pneg %p119
        $region50: #{tpu_custom_call.1} parent=39 // pred_check_branch
          %262 = sbr.rel (%p260) target = $region52
        $region51: #{tpu_custom_call.1} parent=39 // pred_region
          %263 = dma.done [#allocation7], 1024
        $region52: #{tpu_custom_call.1} parent=39 // pred_fallthru
          _
        %s264 = sand.u32 %s43, 1
        %s265 = scalar_lea.sflag [#allocation4], %s264
        %s266 = sand.u32 %s43, 1
        %s267 = smul.addr %s266, 32
        %s268 = scalar_lea.vmem [#allocation3], %s267
        %p269 = pneg %p56
        %p270 = pneg %p53
        %p271 = pneg %p77
        %p272 = pneg %p74
        %p273 = pneg %p98
        %p274 = pneg %p95
        %p275 = pneg %p119
        %p276 = pneg %p116
        %p277 = pneg %p140
        %p278 = pneg %p137
        %p279 = pneg %p166
        %p280 = pneg %p163
        %s281 = smul.u32 8, %s25
        %p283 = scmp.eq.s32.totalorder %s26, 0
        // Predicated region
        $region53: #{tpu_custom_call.1} parent=39 // pred_check
          %p284 = pneg %p283
        $region54: #{tpu_custom_call.1} parent=39 // pred_check_branch
          %286 = sbr.rel (%p284) target = $region56
        $region55: #{tpu_custom_call.1} parent=39 // pred_region
          %287 = vst [vmem:[#allocation2] sm:$0xff] 0.0
        $region56: #{tpu_custom_call.1} parent=39 // pred_fallthru
          _
        %v288 = vld [vmem:[%s251] sm:$0xf]
        %v289 = vld [vmem:[%s251 + $0x4] sm:$0xf]
        %v290 = vld [vmem:[%s251 + $0x8] sm:$0xf]
        %v291 = vld [vmem:[%s251 + $0xc] sm:$0xf]
        %v292 = vld [vmem:[%s251 + $0x10] sm:$0xf]
        %v293 = vld [vmem:[%s251 + $0x14] sm:$0xf]
        %v294 = vld [vmem:[%s251 + $0x18] sm:$0xf]
        %v295 = vld [vmem:[%s251 + $0x1c] sm:$0xf]
        %v296 = vld [vmem:[#allocation6] sm:$0xf]
        %v297 = vld [vmem:[#allocation6 + $0x4] sm:$0xf]
        %v298 = vld [vmem:[#allocation6 + $0x8] sm:$0xf]
        %v299 = vld [vmem:[#allocation6 + $0xc] sm:$0xf]
        %v300 = vld [vmem:[#allocation6 + $0x10] sm:$0xf]
        %v301 = vld [vmem:[#allocation6 + $0x14] sm:$0xf]
        %v302 = vld [vmem:[#allocation6 + $0x18] sm:$0xf]
        %v303 = vld [vmem:[#allocation6 + $0x1c] sm:$0xf]
        %v304 = vld [vmem:[#allocation6 + $0x20] sm:$0xf]
        %v305 = vld [vmem:[#allocation6 + $0x24] sm:$0xf]
        %v306 = vld [vmem:[#allocation6 + $0x28] sm:$0xf]
        %v307 = vld [vmem:[#allocation6 + $0x2c] sm:$0xf]
        %v308 = vld [vmem:[#allocation6 + $0x30] sm:$0xf]
        %v309 = vld [vmem:[#allocation6 + $0x34] sm:$0xf]
        %v310 = vld [vmem:[#allocation6 + $0x38] sm:$0xf]
        %v311 = vld [vmem:[#allocation6 + $0x3c] sm:$0xf]
        %v320 = vunpack.c.l.b16 %v288
        %v321 = vunpack.c.l.b16 %v289
        %v322 = vunpack.c.l.b16 %v290
        %v323 = vunpack.c.l.b16 %v291
        %v324 = vunpack.c.l.b16 %v292
        %v325 = vunpack.c.l.b16 %v293
        %v326 = vunpack.c.l.b16 %v294
        %v327 = vunpack.c.l.b16 %v295
        %v328 = vpack.c.b16 %v321, %v320
        %v329 = vpack.c.b16 %v323, %v322
        %v330 = vpack.c.b16 %v325, %v324
        %v331 = vpack.c.b16 %v327, %v326
        %v352 = vunpack.c.l.b16 %v296
        %v353 = vunpack.c.l.b16 %v297
        %v354 = vunpack.c.l.b16 %v298
        %v355 = vunpack.c.l.b16 %v299
        %v356 = vunpack.c.l.b16 %v300
        %v357 = vunpack.c.l.b16 %v301
        %v358 = vunpack.c.l.b16 %v302
        %v359 = vunpack.c.l.b16 %v303
        %v360 = vunpack.c.l.b16 %v304
        %v361 = vunpack.c.l.b16 %v305
        %v362 = vunpack.c.l.b16 %v306
        %v363 = vunpack.c.l.b16 %v307
        %v364 = vunpack.c.l.b16 %v308
        %v365 = vunpack.c.l.b16 %v309
        %v366 = vunpack.c.l.b16 %v310
        %v367 = vunpack.c.l.b16 %v311
        %v368 = vpack.c.b16 %v353, %v352
        %v369 = vpack.c.b16 %v355, %v354
        %v370 = vpack.c.b16 %v357, %v356
        %v371 = vpack.c.b16 %v359, %v358
        %v372 = vpack.c.b16 %v361, %v360
        %v373 = vpack.c.b16 %v363, %v362
        %v374 = vpack.c.b16 %v365, %v364
        %v375 = vpack.c.b16 %v367, %v366
        %384 = vmatprep.subr.bf16.mxu0 0
        %385 = vmatpush1.bf16.msra.mxu0 %v368
        %386 = vmatprep.subr.bf16.mxu0 0
        %387 = vmatpush1.bf16.msra.mxu0 %v369
        %388 = vmatprep.subr.bf16.mxu0 0
        %389 = vmatpush1.bf16.msra.mxu0 %v370
        %390 = vmatprep.subr.bf16.mxu0 0
        %391 = vmatpush1.bf16.msra.mxu0 %v371
        %392 = vmatprep.subr.bf16.mxu0 0
        %393 = vmatpush1.bf16.msra.mxu0 %v372
        %394 = vmatprep.subr.bf16.mxu0 0
        %395 = vmatpush1.bf16.msra.mxu0 %v373
        %396 = vmatprep.subr.bf16.mxu0 0
        %397 = vmatpush1.bf16.msra.mxu0 %v374
        %398 = vmatprep.subr.bf16.mxu0 0
        %399 = vmatpush1.bf16.msra.mxu0 %v375
        %400 = vmatprep.subr.bf16.mxu0 0
        %401 = vmatpush1.bf16.msra.mxu0 0
        %402 = vmatprep.subr.bf16.mxu0 0
        %403 = vmatpush1.bf16.msra.mxu0 0
        %404 = vmatprep.subr.bf16.mxu0 0
        %405 = vmatpush1.bf16.msra.mxu0 0
        %406 = vmatprep.subr.bf16.mxu0 0
        %407 = vmatpush1.bf16.msra.mxu0 0
        %408 = vmatprep.subr.bf16.mxu0 0
        %409 = vmatpush1.bf16.msra.mxu0 0
        %410 = vmatprep.subr.bf16.mxu0 0
        %411 = vmatpush1.bf16.msra.mxu0 0
        %412 = vmatprep.subr.bf16.mxu0 0
        %413 = vmatpush1.bf16.msra.mxu0 0
        %414 = vmatprep.subr.bf16.mxu0 0
        %415 = vmatpush1.bf16.msra.mxu0 0
        %416 = vmatprep.mubr.bf16.mxu0 0
        %417 = vmatmul.mubr.bf16.gmra.mrb[0].mxu0 %v328
        %v418 = vpop.f32.mrb[0].mxu0
        %v419 = vadd.f32 0.0, %v418
        %v420 = vpop.f32.mrb[0].mxu0
        %v421 = vpop.f32.mrb[0].mxu0
        %v422 = vadd.f32 0.0, %v421
        %v423 = vpop.f32.mrb[0].mxu0
        %424 = vmatprep.mubr.bf16.mxu0 0
        %425 = vmatmul.mubr.bf16.gmra.mrb[0].mxu0 %v329
        %v426 = vpop.f32.mrb[0].mxu0
        %v427 = vadd.f32 0.0, %v426
        %v428 = vpop.f32.mrb[0].mxu0
        %v429 = vpop.f32.mrb[0].mxu0
        %v430 = vadd.f32 0.0, %v429
        %v431 = vpop.f32.mrb[0].mxu0
        %432 = vmatprep.mubr.bf16.mxu0 0
        %433 = vmatmul.mubr.bf16.gmra.mrb[0].mxu0 %v330
        %v434 = vpop.f32.mrb[0].mxu0
        %v435 = vadd.f32 0.0, %v434
        %v436 = vpop.f32.mrb[0].mxu0
        %v437 = vpop.f32.mrb[0].mxu0
        %v438 = vadd.f32 0.0, %v437
        %v439 = vpop.f32.mrb[0].mxu0
        %440 = vmatprep.mubr.bf16.mxu0 0
        %441 = vmatmul.mubr.bf16.gmra.mrb[0].mxu0 %v331
        %v442 = vpop.f32.mrb[0].mxu0
        %v443 = vadd.f32 0.0, %v442
        %v444 = vpop.f32.mrb[0].mxu0
        %v445 = vpop.f32.mrb[0].mxu0
        %v446 = vadd.f32 0.0, %v445
        %v447 = vpop.f32.mrb[0].mxu0
        %448 = vdwg.mxu0
        %v449 = vld [vmem:[#allocation2] sm:$0xff]
        %v450 = vrot.slane %v419, 4
        %v451 = vadd.f32 %v419, %v450
        %v452 = vrot.slane %v451, 2
        %v453 = vadd.f32 %v451, %v452
        %v454 = vrot.slane %v453, 1
        %v455 = vadd.f32 %v453, %v454
        %v456 = vrot.slane %v422, 4
        %v457 = vadd.f32 %v422, %v456
        %v458 = vrot.slane %v457, 2
        %v459 = vadd.f32 %v457, %v458
        %v460 = vrot.slane %v459, 1
        %v461 = vadd.f32 %v459, %v460
        %v462 = vrot.slane %v427, 4
        %v463 = vadd.f32 %v427, %v462
        %v464 = vrot.slane %v463, 2
        %v465 = vadd.f32 %v463, %v464
        %v466 = vrot.slane %v465, 1
        %v467 = vadd.f32 %v465, %v466
        %v468 = vrot.slane %v430, 4
        %v469 = vadd.f32 %v430, %v468
        %v470 = vrot.slane %v469, 2
        %v471 = vadd.f32 %v469, %v470
        %v472 = vrot.slane %v471, 1
        %v473 = vadd.f32 %v471, %v472
        %v474 = vrot.slane %v435, 4
        %v475 = vadd.f32 %v435, %v474
        %v476 = vrot.slane %v475, 2
        %v477 = vadd.f32 %v475, %v476
        %v478 = vrot.slane %v477, 1
        %v479 = vadd.f32 %v477, %v478
        %v480 = vrot.slane %v438, 4
        %v481 = vadd.f32 %v438, %v480
        %v482 = vrot.slane %v481, 2
        %v483 = vadd.f32 %v481, %v482
        %v484 = vrot.slane %v483, 1
        %v485 = vadd.f32 %v483, %v484
        %v486 = vrot.slane %v443, 4
        %v487 = vadd.f32 %v443, %v486
        %v488 = vrot.slane %v487, 2
        %v489 = vadd.f32 %v487, %v488
        %v490 = vrot.slane %v489, 1
        %v491 = vadd.f32 %v489, %v490
        %v492 = vrot.slane %v446, 4
        %v493 = vadd.f32 %v446, %v492
        %v494 = vrot.slane %v493, 2
        %v495 = vadd.f32 %v493, %v494
        %v496 = vrot.slane %v495, 1
        %v497 = vadd.f32 %v495, %v496
        %vm506 = vcmask 1041409
        %v507 = vsel %vm506, %v461, %v455
        %vm508 = vcmask 1042434
        %v509 = vsel %vm508, %v467, %v507
        %vm510 = vcmask 1043459
        %v511 = vsel %vm510, %v473, %v509
        %vm512 = vcmask 1044484
        %v513 = vsel %vm512, %v479, %v511
        %vm514 = vcmask 1045509
        %v515 = vsel %vm514, %v485, %v513
        %vm516 = vcmask 1046534
        %v517 = vsel %vm516, %v491, %v515
        %vm518 = vcmask 1047559
        %v519 = vsel %vm518, %v497, %v517
        %v521 = vadd.f32 %v449, %v519
        %522 = vst [vmem:[#allocation2] sm:$0xff] %v521
        %p523 = scmp.eq.s32.totalorder %s26, 1
        // Predicated region
        $region57: #{tpu_custom_call.1} parent=39 // pred_check
          %p524 = pneg %p523
        $region58: #{tpu_custom_call.1} parent=39 // pred_check_branch
          %526 = sbr.rel (%p524) target = $region60
        $region59: #{tpu_custom_call.1} parent=39 // pred_region
          %v527 = vld [vmem:[#allocation2] sm:$0xff]
          %v528 = vmul.f32 %v527, 0.0625
          %v529 = vld [vmem:[%s2] sm:$0x1]
          %v530 = vunpack.c.l.bf16 %v529
          %v531 = vlaneseq
          %v532 = vshrl.u32 %v531, 7
          %v533 = vsub.s32 0, %v532
          %v534 = vrot.slane %v530, %v533
          %v535 = vadd.f32 %v528, %v534
          %v536 = vmax.f32 %v535, 0.0
          %v537 = vld [vmem:[#allocation8] sm:$0xf]
          %v538 = vld [vmem:[#allocation8 + $0x4] sm:$0xf]
          %v539 = vld [vmem:[#allocation8 + $0x8] sm:$0xf]
          %v540 = vld [vmem:[#allocation8 + $0xc] sm:$0xf]
          %v541 = vld [vmem:[#allocation8 + $0x10] sm:$0xf]
          %v542 = vld [vmem:[#allocation8 + $0x14] sm:$0xf]
          %v543 = vld [vmem:[#allocation8 + $0x18] sm:$0xf]
          %v544 = vld [vmem:[#allocation8 + $0x1c] sm:$0xf]
          %v545 = vld [vmem:[#allocation8 + $0x20] sm:$0xf]
          %v546 = vld [vmem:[#allocation8 + $0x24] sm:$0xf]
          %v547 = vld [vmem:[#allocation8 + $0x28] sm:$0xf]
          %v548 = vld [vmem:[#allocation8 + $0x2c] sm:$0xf]
          %v549 = vld [vmem:[#allocation8 + $0x30] sm:$0xf]
          %v550 = vld [vmem:[#allocation8 + $0x34] sm:$0xf]
          %v551 = vld [vmem:[#allocation8 + $0x38] sm:$0xf]
          %v552 = vld [vmem:[#allocation8 + $0x3c] sm:$0xf]
          %v553 = vunpack.c.l.bf16 %v537
          %v554 = vunpack.c.l.bf16 %v538
          %v555 = vunpack.c.l.bf16 %v539
          %v556 = vunpack.c.l.bf16 %v540
          %v557 = vunpack.c.l.bf16 %v541
          %v558 = vunpack.c.l.bf16 %v542
          %v559 = vunpack.c.l.bf16 %v543
          %v560 = vunpack.c.l.bf16 %v544
          %v561 = vunpack.c.l.bf16 %v545
          %v562 = vunpack.c.l.bf16 %v546
          %v563 = vunpack.c.l.bf16 %v547
          %v564 = vunpack.c.l.bf16 %v548
          %v565 = vunpack.c.l.bf16 %v549
          %v566 = vunpack.c.l.bf16 %v550
          %v567 = vunpack.c.l.bf16 %v551
          %v568 = vunpack.c.l.bf16 %v552
          %v569 = vld [vmem:[%s4] sm:$0x1]
          %v570 = vunpack.c.l.bf16 %v569
          %v571 = vlaneseq
          %v572 = vshrl.u32 %v571, 7
          %v573 = vsub.s32 0, %v572
          %v574 = vrot.slane %v570, %v573
          %575 = vmatprep.subr.mxu0 0.0
          %576 = vmatpush1.msra.mxu0 %v553
          %577 = vmatprep.subr.mxu0 0.0
          %578 = vmatpush1.msra.mxu0 %v554
          %579 = vmatprep.subr.mxu0 0.0
          %580 = vmatpush1.msra.mxu0 %v555
          %581 = vmatprep.subr.mxu0 0.0
          %582 = vmatpush1.msra.mxu0 %v556
          %583 = vmatprep.subr.mxu0 0.0
          %584 = vmatpush1.msra.mxu0 %v557
          %585 = vmatprep.subr.mxu0 0.0
          %586 = vmatpush1.msra.mxu0 %v558
          %587 = vmatprep.subr.mxu0 0.0
          %588 = vmatpush1.msra.mxu0 %v559
          %589 = vmatprep.subr.mxu0 0.0
          %590 = vmatpush1.msra.mxu0 %v560
          %591 = vmatprep.subr.mxu0 0.0
          %592 = vmatpush1.msra.mxu0 %v561
          %593 = vmatprep.subr.mxu0 0.0
          %594 = vmatpush1.msra.mxu0 %v562
          %595 = vmatprep.subr.mxu0 0.0
          %596 = vmatpush1.msra.mxu0 %v563
          %597 = vmatprep.subr.mxu0 0.0
          %598 = vmatpush1.msra.mxu0 %v564
          %599 = vmatprep.subr.mxu0 0.0
          %600 = vmatpush1.msra.mxu0 %v565
          %601 = vmatprep.subr.mxu0 0.0
          %602 = vmatpush1.msra.mxu0 %v566
          %603 = vmatprep.subr.mxu0 0.0
          %604 = vmatpush1.msra.mxu0 %v567
          %605 = vmatprep.subr.mxu0 0.0
          %606 = vmatpush1.msra.mxu0 %v568
          %607 = vmatprep.subr.mxu0 0.0
          %608 = vmatpush1.msra.mxu0 0.0
          %609 = vmatprep.subr.mxu0 0.0
          %610 = vmatpush1.msra.mxu0 0.0
          %611 = vmatprep.subr.mxu0 0.0
          %612 = vmatpush1.msra.mxu0 0.0
          %613 = vmatprep.subr.mxu0 0.0
          %614 = vmatpush1.msra.mxu0 0.0
          %615 = vmatprep.subr.mxu0 0.0
          %616 = vmatpush1.msra.mxu0 0.0
          %617 = vmatprep.subr.mxu0 0.0
          %618 = vmatpush1.msra.mxu0 0.0
          %619 = vmatprep.subr.mxu0 0.0
          %620 = vmatpush1.msra.mxu0 0.0
          %621 = vmatprep.subr.mxu0 0.0
          %622 = vmatpush1.msra.mxu0 0.0
          %623 = vmatprep.subr.mxu0 0.0
          %624 = vmatpush1.msra.mxu0 0.0
          %625 = vmatprep.subr.mxu0 0.0
          %626 = vmatpush1.msra.mxu0 0.0
          %627 = vmatprep.subr.mxu0 0.0
          %628 = vmatpush1.msra.mxu0 0.0
          %629 = vmatprep.subr.mxu0 0.0
          %630 = vmatpush1.msra.mxu0 0.0
          %631 = vmatprep.subr.mxu0 0.0
          %632 = vmatpush1.msra.mxu0 0.0
          %633 = vmatprep.subr.mxu0 0.0
          %634 = vmatpush1.msra.mxu0 0.0
          %635 = vmatprep.subr.mxu0 0.0
          %636 = vmatpush1.msra.mxu0 0.0
          %637 = vmatprep.subr.mxu0 0.0
          %638 = vmatpush1.msra.mxu0 0.0
          %639 = vmatprep.mubr.f32.mxu0 0.0
          %640 = vmatmul.mubr.f32.gmra.mrb[0].mxu0 %v536
          %v641 = vpop.f32.mrb[0].mxu0
          %v642 = vadd.f32 %v574, %v641
          %v643 = vpop.f32.mrb[0].mxu0
          %644 = vdwg.mxu0
          %645 = vst [vmem:[#allocation9] sm:$0xff] %v642
        $region60: #{tpu_custom_call.1} parent=39 // pred_fallthru
          _
        // Predicated region
        $region61: #{tpu_custom_call.1} parent=39 // pred_check
          %p646 = pneg %p163
        $region62: #{tpu_custom_call.1} parent=39 // pred_check_branch
          %648 = sbr.rel (%p646) target = $region64
        $region63: #{tpu_custom_call.1} parent=39 // pred_region
          %s650 = ssub.s32 128, 128
          %651 = vsyncadd [#allocation5], %s650
          %s652 = smul.addr %s25, 128
          %s653 = scalar_lea.hbm %s5, %s652
          %s655 = sshll.u32 [#allocation9], 4
          %s656 = int_to_ptr.vmem [resolvable:$true] %s655
          %658 = dma.vmem_to_hbm [thread:$0]  %s656, 128, %s653, [#allocation5]
        $region64: #{tpu_custom_call.1} parent=39 // pred_fallthru
          _
        // Predicated region
        $region65: #{tpu_custom_call.1} parent=39 // pred_check
          %p659 = pneg %p163
        $region66: #{tpu_custom_call.1} parent=39 // pred_check_branch
          %661 = sbr.rel (%p659) target = $region68
        $region67: #{tpu_custom_call.1} parent=39 // pred_region
          %662 = dma.done [#allocation5], 128
        $region68: #{tpu_custom_call.1} parent=39 // pred_fallthru
          _
      $region40: #{tpu_custom_call.1} parent=5 // pred_fallthru
        _
      %p663 = scmp.le.s32.totalorder 2, %s16
      // Predicated region
      $region69: #{tpu_custom_call.1} parent=5 // pred_check
        %p664 = pneg %p663
      $region70: #{tpu_custom_call.1} parent=5 // pred_check_branch
        %666 = sbr.rel (%p664) target = $region72
      $region71: #{tpu_custom_call.1} parent=5 // pred_region
        %s667 = ssub.s32 %s16, 2
      $region72: #{tpu_custom_call.1} parent=5 // pred_fallthru
        _
    $region6: #{tpu_custom_call.1} parent=1 // loop_footer
      %s20 = sadd.s32 1, %s16
    $region7: #{tpu_custom_call.1} parent=1 // loop_footer_branch
      %15 = sbr.rel target = $region3
    $region8: #{tpu_custom_call.1} parent=1 // loop_exit
      _
    %668 = vsyncpa [#allocation4], 1
    %s669 = scalar_lea.sflag [#allocation4], 1
    %670 = vsyncpa %s669, 1
    %671 = vsyncpa [#allocation7], 1
    %672 = vsyncpa [#allocation5], 1
    %s673 = scalar_lea.sflag [#allocation5], 1
    %674 = vsyncpa %s673, 1

</llo_original>
